<compile_context>
chip_gen: v5e
topology: v5e:2x2
jax: 0.10.0
libtpu: 0.0.40
codegen_flags: <defaults>
</compile_context>

<pallas_src>
import jax
import jax.numpy as jnp
from jax.experimental import pallas as pl
from jax.experimental.pallas import tpu as pltpu


def _nsp_head_kernel(x_ref, w_ref, b_ref, o_ref):
    # x_ref: [TB, H]  VMEM tile (pipelined over the batch grid)
    # w_ref: [2, H]   VMEM, resident across all grid steps (constant index map)
    # b_ref: [2, 1]   VMEM, resident
    # o_ref: [2, TB]  VMEM output tile (lane-dense: TB lanes, unmasked stores)
    x = x_ref[...]
    w = w_ref[...]

    # y[n, m] = sum_k w[n, k] * x[m, k]  == (x @ W.T).T, with no in-kernel transpose:
    # contract the last dim of w against the last dim of x.
    y = jax.lax.dot_general(
        w,
        x,
        dimension_numbers=(((1,), (1,)), ((), ())),
        preferred_element_type=jnp.float32,
    )

    # Plain sublane broadcast bias add: (2, 1) + (2, TB).
    y = y + b_ref[...]

    o_ref[...] = y.astype(o_ref.dtype)


def _pick_batch_tile(B, H, itemsize):
    """Pick TB (rows per grid step) for the x stream.

    Constraints:
      * (2, TB) output block -> TB must be a multiple of 128 (lane dim) or == B.
      * Double-buffered x tile (2 * TB * H * itemsize) budgeted to ~20 MiB so it
        fits every generation's scoped VMEM at the 32 MiB limit we request.
      * On v7x, aim for >= ~4 grid steps so both TensorCores get work.
    """
    budget_bytes = 20 * 1024 * 1024
    cap = min(2048, max(128, budget_bytes // (2 * H * itemsize)))
    cap = (cap // 128) * 128

    if B <= cap:
        if B >= 512:
            # Split into ~4 lane-dense tiles for v7x megacore + per-core pipelining.
            tb = ((-(-B // 4)) + 127) // 128 * 128  # round_up(cdiv(B, 4), 128)
            return min(tb, cap)
        # Tiny batch: single full-array tile (block == full dim is always legal).
        return B
    return cap


def bert_only_nsp_head(pooled_output, weight, bias, *, force_pallas=False):
    """pooled_output: [B, H]; weight: [2, H]; bias: [2] -> [B, 2]."""
    B, H = pooled_output.shape
    num_labels, Hw = weight.shape
    assert Hw == H and num_labels == 2
    assert bias.shape == (num_labels,)

    itemsize = jnp.dtype(pooled_output.dtype).itemsize

    # Fast path: at small activation sizes the kernel is pure launch overhead and
    # XLA fusion is strictly faster.
    if not force_pallas and B * H * itemsize < (1 << 20):
        return pooled_output @ weight.T + bias

    TB = _pick_batch_tile(B, H, itemsize)
    grid = (pl.cdiv(B, TB),)

    bias2d = bias.reshape(num_labels, 1)

    out_t = pl.pallas_call(
        _nsp_head_kernel,
        out_shape=jax.ShapeDtypeStruct((num_labels, B), pooled_output.dtype),
        grid_spec=pltpu.PrefetchScalarGridSpec(
            num_scalar_prefetch=0,
            grid=grid,
            in_specs=[
                # x: tiled over the batch axis -> software-pipelined HBM reads.
                pl.BlockSpec((TB, H), lambda i: (i, 0)),
                # weight: constant index map -> fetched once, VMEM-resident.
                pl.BlockSpec((num_labels, H), lambda i: (0, 0)),
                # bias (2, 1): constant index map -> fetched once, VMEM-resident.
                pl.BlockSpec((num_labels, 1), lambda i: (0, 0)),
            ],
            # Lane-dense output: (2, TB) block, TB lanes -> unmasked vst, contiguous DMA.
            out_specs=pl.BlockSpec((num_labels, TB), lambda i: (0, i)),
        ),
        compiler_params=pltpu.CompilerParams(
            # Independent batch tiles -> v7x's two TensorCores split the grid;
            # harmless no-op on v5e/v6e.
            dimension_semantics=("parallel",),
            # Explicit limit so v5e's 16 MiB scoped default is not the gate; safely
            # under physical VMEM on every generation (v7x: 64 MiB).
            vmem_limit_bytes=32 * 1024 * 1024,
        ),
        cost_estimate=pl.CostEstimate(
            flops=2 * B * H * num_labels,
            transcendentals=0,
            bytes_accessed=B * H * itemsize
            + num_labels * H * itemsize
            + B * num_labels * itemsize,
        ),
    )(pooled_output, weight, bias2d)

    # Trivial (2, B) -> (B, 2) transpose in the wrapper; negligible cost.
    return out_t.T


if __name__ == "__main__":
    key = jax.random.PRNGKey(0)

    # --- Test 1: small, deterministic config (batch=2, hidden_size=32, num_labels=2),
    # forced through the Pallas path (single full-array tile). ---
    batch, hidden_size, num_labels = 2, 32, 2
    k_x, k_w, k_b = jax.random.split(key, 3)
    pooled_output = jax.random.normal(k_x, (batch, hidden_size), dtype=jnp.float32)
    weight = jax.random.normal(k_w, (num_labels, hidden_size), dtype=jnp.float32) * 0.02
    bias = jax.random.normal(k_b, (num_labels,), dtype=jnp.float32) * 0.02

    out = bert_only_nsp_head(pooled_output, weight, bias, force_pallas=True)
    out = jax.block_until_ready(out)
    ref = pooled_output @ weight.T + bias
    assert out.shape == (batch, num_labels)
    assert jnp.allclose(out, ref, atol=1e-5, rtol=1e-5)

    # --- Test 2: exercise the multi-step grid (TB=256 -> 3 grid steps, last one
    # partial) while staying tiny in memory. ---
    batch2, hidden2 = 640, 64
    k_x2, k_w2, k_b2 = jax.random.split(jax.random.PRNGKey(1), 3)
    x2 = jax.random.normal(k_x2, (batch2, hidden2), dtype=jnp.float32)
    w2 = jax.random.normal(k_w2, (num_labels, hidden2), dtype=jnp.float32) * 0.02
    b2 = jax.random.normal(k_b2, (num_labels,), dtype=jnp.float32) * 0.02

    out2 = bert_only_nsp_head(x2, w2, b2, force_pallas=True)
    out2 = jax.block_until_ready(out2)
    ref2 = x2 @ w2.T + b2
    assert out2.shape == (batch2, num_labels)
    assert jnp.allclose(out2, ref2, atol=1e-5, rtol=1e-5)

    print("KERNEL_OK")
</pallas_src>

<mosaic_0001>
module attributes {stable_mosaic.version = 11 : i64} {
  func.func @_nsp_head_kernel(%arg0: i32, %arg1: memref<2x32xf32, #tpu.memory_space<vmem>>, %arg2: memref<2x32xf32, #tpu.memory_space<vmem>>, %arg3: memref<2x1xf32, #tpu.memory_space<vmem>>, %arg4: memref<2x2xf32, #tpu.memory_space<vmem>>) attributes {dimension_semantics = [#tpu.dimension_semantics<parallel>], iteration_bounds = array<i64: 1>, scalar_prefetch = 0 : i64, scratch_operands = 0 : i64, tpu.core_type = #tpu.core_type<tc>, window_params = [{transform_indices = @transform_0, window_bounds = array<i64: 2, 32>}, {pipeline_mode = #tpu.pipeline_mode<synchronous>, transform_indices = @transform_1, window_bounds = array<i64: 2, 32>}, {pipeline_mode = #tpu.pipeline_mode<synchronous>, transform_indices = @transform_2, window_bounds = array<i64: 2, 1>}, {transform_indices = @transform_3, window_bounds = array<i64: 2, 2>}]} {
    %c0 = arith.constant 0 : index
    %c0_0 = arith.constant 0 : index
    %0 = vector.load %arg1[%c0, %c0_0] : memref<2x32xf32, #tpu.memory_space<vmem>>, vector<2x32xf32>
    %c0_1 = arith.constant 0 : index
    %c0_2 = arith.constant 0 : index
    %1 = vector.load %arg2[%c0_1, %c0_2] : memref<2x32xf32, #tpu.memory_space<vmem>>, vector<2x32xf32>
    %cst = arith.constant dense<0.000000e+00> : vector<2x2xf32>
    %2 = tpu.matmul %1, %0, %cst {dimension_numbers = #tpu.dot_dimension_numbers<[1], [1], [0], [0], [0, 0, 1, 0], [], []>} : vector<2x32xf32>, vector<2x32xf32>, vector<2x2xf32> -> vector<2x2xf32>
    %c0_3 = arith.constant 0 : index
    %c0_4 = arith.constant 0 : index
    %3 = vector.load %arg3[%c0_3, %c0_4] : memref<2x1xf32, #tpu.memory_space<vmem>>, vector<2x1xf32>
    %4 = vector.broadcast %3 : vector<2x1xf32> to vector<2x2xf32>
    %5 = arith.addf %2, %4 : vector<2x2xf32>
    %c0_5 = arith.constant 0 : index
    %c0_6 = arith.constant 0 : index
    %6 = vector.load %arg4[%c0_5, %c0_6] : memref<2x2xf32, #tpu.memory_space<vmem>>, vector<2x2xf32>
    tpu.vector_store %arg4[%c0_5, %c0_6], %5 {strides = array<i32>} : memref<2x2xf32, #tpu.memory_space<vmem>>, vector<2x2xf32>,
    return
  }
  func.func @transform_0(%arg0: i32) -> (i32, i32) {
    %c0_i32 = arith.constant 0 : i32
    %c0_i32_0 = arith.constant 0 : i32
    return %arg0, %c0_i32 : i32, i32
  }
  func.func @transform_1(%arg0: i32) -> (i32, i32) {
    %c0_i32 = arith.constant 0 : i32
    %c0_i32_0 = arith.constant 0 : i32
    %c0_i32_1 = arith.constant 0 : i32
    return %c0_i32, %c0_i32_0 : i32, i32
  }
  func.func @transform_2(%arg0: i32) -> (i32, i32) {
    %c0_i32 = arith.constant 0 : i32
    %c0_i32_0 = arith.constant 0 : i32
    %c0_i32_1 = arith.constant 0 : i32
    return %c0_i32, %c0_i32_0 : i32, i32
  }
  func.func @transform_3(%arg0: i32) -> (i32, i32) {
    %c0_i32 = arith.constant 0 : i32
    %c0_i32_0 = arith.constant 0 : i32
    return %c0_i32, %arg0 : i32, i32
  }
}

</mosaic_0001>

<llo_original>
// kernel: tpu_custom_call.1
$region0: #{tpu_custom_call.1}
  #allocation0 [shape = 'u32[]', space=smem, size = 0x4, offset = 0x4, fixed_abs, tag = 'smem constant byte address 0x4 - core index']
  #allocation1 [shape = 'u32[72,128]{1,0:T(1,128)}', space=vmem, size = 0x9000, scoped, tag = 'internal scratch']
  %s0 = inlined_call_operand.vmem [shape: f32[2,32], index: 0, kind: input, shape index: {}]
  %s1 = inlined_call_operand.hbm [shape: f32[2,32], index: 1, kind: input, shape index: {}]
  %s2 = inlined_call_operand.vmem [shape: f32[2,1], index: 2, kind: input, shape index: {}]
  %s3 = inlined_call_operand.hbm [shape: f32[2,2], index: 3, kind: output, shape index: {}]
  %s4 = sld [smem:[#allocation0]]
  $region26: #{tpu_custom_call.1} parent=0
    _
  %s6 = ssub.s32 1, %s4
  %s7 = scalar_select 0, %s6, %s4
  $region1: #{tpu_custom_call.1} parent=0
    #allocation2 [shape = 'u8[1024]{0}', space=vmem, size = 0x400, scoped, tag = 'input window, operand 1, single buffered']
    #allocation3 [shape = 's32[1]{0}', space=sflag, size = 0x4, scoped, tag = 'scoped memory for tpu_custom_call.1']
    #allocation4 [shape = 's32[1]{0}', space=sflag, size = 0x4, scoped, tag = 'scoped memory for tpu_custom_call.1']
    #allocation5 [shape = 'u8[1024]{0}', space=vmem, size = 0x400, scoped, tag = 'output window, operand 0, single buffered']
    %8 = vsyncpa [#allocation3], 0
    %9 = vsyncpa [#allocation4], 0
    // Predicated region
    $region2: #{tpu_custom_call.1} parent=1 // pred_check
      _
    $region3: #{tpu_custom_call.1} parent=1 // pred_check_branch
      %11 = sbr.rel (0) target = $region5
    $region4: #{tpu_custom_call.1} parent=1 // pred_region
      _
    $region5: #{tpu_custom_call.1} parent=1 // pred_fallthru
      _
    // Predicated region
    $region6: #{tpu_custom_call.1} parent=1 // pred_check
      _
    $region7: #{tpu_custom_call.1} parent=1 // pred_check_branch
      %13 = sbr.rel (0) target = $region9
    $region8: #{tpu_custom_call.1} parent=1 // pred_region
      %15 = vsyncadd [#allocation3], 0
      %s17 = sshll.u32 %s1, 4
      %s18 = int_to_ptr.hbm [resolvable:$true] %s17
      %s19 = sshll.u32 [#allocation2], 4
      %s20 = int_to_ptr.vmem [resolvable:$true] %s19
      %22 = dma.hbm_to_vmem [thread:$0]  %s18, 32, %s20, [#allocation3]
    $region9: #{tpu_custom_call.1} parent=1 // pred_fallthru
      _
    // Predicated region
    $region10: #{tpu_custom_call.1} parent=1 // pred_check
      _
    $region11: #{tpu_custom_call.1} parent=1 // pred_check_branch
      %24 = sbr.rel (0) target = $region13
    $region12: #{tpu_custom_call.1} parent=1 // pred_region
      _
    $region13: #{tpu_custom_call.1} parent=1 // pred_fallthru
      _
    // Predicated region
    $region14: #{tpu_custom_call.1} parent=1 // pred_check
      _
    $region15: #{tpu_custom_call.1} parent=1 // pred_check_branch
      %26 = sbr.rel (0) target = $region17
    $region16: #{tpu_custom_call.1} parent=1 // pred_region
      %28 = dma.done [#allocation3], 32
    $region17: #{tpu_custom_call.1} parent=1 // pred_fallthru
      _
    %v29 = vld [vmem:[%s0] sm:$0x3]
    %v30 = vld [vmem:[#allocation2] sm:$0x3]
    %v31 = vld [vmem:[%s2] sm:$0x3]
    %33 = vset.pattern.permute.xlu0 0
    %34 = vperm.xlu0 %33, %v31
    %v35 = vpop.permute.xlu0 %34
    %vm37 = vcmask 261120
    %v39 = vsel %vm37, %v30, 0
    %v42 = vsel %vm37, %v29, 0
    %44 = vmatpush.xpose.msra.mxu0 0.0
    %45 = vmatpush.xpose.msra.mxu0 0.0
    %46 = vmatpush.xpose.msra.mxu0 0.0
    %47 = vmatpush.xpose.msra.mxu0 0.0
    %48 = vmatpush.xpose.msra.mxu0 0.0
    %49 = vmatpush.xpose.msra.mxu0 0.0
    %50 = vmatpush.xpose.msra.mxu0 0.0
    %51 = vmatpush.xpose.msra.mxu0 0.0
    %52 = vmatpush.xpose.msra.mxu0 0.0
    %53 = vmatpush.xpose.msra.mxu0 0.0
    %54 = vmatpush.xpose.msra.mxu0 0.0
    %55 = vmatpush.xpose.msra.mxu0 0.0
    %56 = vmatpush.xpose.msra.mxu0 0.0
    %57 = vmatpush.xpose.msra.mxu0 0.0
    %58 = vmatpush.xpose.msra.mxu0 0.0
    %59 = vmatpush.xpose.msra.mxu0 %v42
    %60 = vmatmul.f32.gmra.mxu0 %v39
    %v61 = vpop.f32.mrf.mxu0
    %v62 = vadd.f32 %v35, %v61
    %63 = vdwg.mxu0
    %vm64 = vcmask 9216
    %65 = vst.msk [vmem:[#allocation5] sm:$0x3] %vm64, %v62
    // Predicated region
    $region18: #{tpu_custom_call.1} parent=1 // pred_check
      _
    $region19: #{tpu_custom_call.1} parent=1 // pred_check_branch
      %67 = sbr.rel (0) target = $region21
    $region20: #{tpu_custom_call.1} parent=1 // pred_region
      %69 = vsyncadd [#allocation4], 0
      %s71 = sshll.u32 [#allocation5], 4
      %s72 = int_to_ptr.vmem [resolvable:$true] %s71
      %s73 = sshll.u32 %s3, 4
      %s74 = int_to_ptr.hbm [resolvable:$true] %s73
      %76 = dma.vmem_to_hbm [thread:$0]  %s72, 32, %s74, [#allocation4]
    $region21: #{tpu_custom_call.1} parent=1 // pred_fallthru
      _
    // Predicated region
    $region22: #{tpu_custom_call.1} parent=1 // pred_check
      _
    $region23: #{tpu_custom_call.1} parent=1 // pred_check_branch
      %78 = sbr.rel (0) target = $region25
    $region24: #{tpu_custom_call.1} parent=1 // pred_region
      %80 = dma.done [#allocation4], 32
    $region25: #{tpu_custom_call.1} parent=1 // pred_fallthru
      _
    %81 = vsyncpa [#allocation3], 1
    %82 = vsyncpa [#allocation4], 1

</llo_original>
